<compile_context>
chip_gen: v5e
topology: v5e:2x2
jax: 0.10.0
libtpu: 0.0.40
codegen_flags: <defaults>
</compile_context>

<pallas_src>
import functools
import math

import jax
import jax.numpy as jnp
from jax import lax
from jax.experimental import pallas as pl
from jax.experimental.pallas import tpu as pltpu


def _biasfree_ln_kernel(eps, inv_c, x_ref, w_ref, o_ref):
    """x_ref: (T, C) rows x channels; w_ref: (1, C); o_ref: (T, C)."""
    xf = x_ref[...].astype(jnp.float32)                 # stats in f32 always
    w = w_ref[...].astype(jnp.float32)                  # (1, C), sublane-broadcast

    # Single-pass moments: two independent cross-lane reductions (XLU).
    s1 = jnp.sum(xf, axis=-1, keepdims=True)
    s2 = jnp.sum(xf * xf, axis=-1, keepdims=True)
    mean = s1 * inv_c
    var = s2 * inv_c - mean * mean                      # unbiased=False variance
    inv_sigma = lax.rsqrt(var + eps)                    # EUP transcendental slot

    # Bias-free: scale raw x (NOT x - mean), then apply the learned weight.
    o_ref[...] = (xf * inv_sigma * w).astype(o_ref.dtype)


def _sublane_multiple(dtype):
    itemsize = jnp.dtype(dtype).itemsize
    if itemsize >= 4:
        return 8
    if itemsize == 2:
        return 16
    return 32


def _default_vmem_limit():
    """~50% of physical per-TC VMEM: 64 MiB on v5e/v6e, 32 MiB on v7x."""
    try:
        cap = pltpu.get_tpu_info().vmem_capacity_bytes
    except Exception:
        cap = 64 * 1024 * 1024
    return max(16 * 1024 * 1024, min(cap // 2, 64 * 1024 * 1024))


def _pick_block_rows(n_rows, n_cols, in_itemsize, sublane, vmem_budget,
                     target_block_bytes=2 * 1024 * 1024, min_steps=8):
    """Largest row tile that fits the VMEM budget and a ~2 MiB block target,
    while keeping enough grid steps for pipelining / both v7x TCs."""
    in_row_bytes = n_cols * in_itemsize
    # Per-row VMEM cost: double-buffered input + double-buffered output
    # (same dtype) plus ~3 f32-sized working copies inside the kernel body.
    per_row = 4 * in_row_bytes + 3 * n_cols * 4
    by_vmem = max(1, vmem_budget // per_row)
    by_target = max(1, target_block_bytes // in_row_bytes)
    t = min(by_vmem, by_target, n_rows)

    # Keep >= min_steps grid steps (when the problem is big enough) so the
    # two v7x TensorCores split evenly and the pipeline double-buffers.
    if n_rows > sublane * min_steps:
        t = min(t, pl.cdiv(n_rows, min_steps))

    if t < n_rows:
        # Dtype-aware sublane rounding (bf16 vregs pack (16,128)).
        t = max(sublane, (t // sublane) * sublane)
        # Prefer a divisor of n_rows nearby so the tail tile isn't a masked
        # vst.msk partial store (matters most on v5e's single vst slot).
        if n_rows % t != 0:
            for cand in range(t, max(sublane, t // 2) - 1, -sublane):
                if n_rows % cand == 0:
                    t = cand
                    break
    return min(t, n_rows)
    # NOTE: for very large C the minimal (sublane, C) tile may still exceed
    # the budget; the block's last dim must stay == C for the row reduction,
    # so we rely on vmem_limit_bytes headroom in that edge case.


def biasfree_layernorm(x, weight, *, eps=1e-5, vmem_limit_bytes=None):
    """BiasFree LayerNorm over the last dim. x: (..., C); weight: (C,)."""
    orig_shape = x.shape
    C = orig_shape[-1]
    if weight.shape != (C,):
        raise ValueError(f"weight shape {weight.shape} != ({C},)")
    n_rows = math.prod(orig_shape[:-1]) if len(orig_shape) > 1 else 1

    x2 = x.reshape(n_rows, C)            # free reshape; C stays on lanes
    w2 = weight.reshape(1, C)

    if vmem_limit_bytes is None:
        vmem_limit_bytes = _default_vmem_limit()
    # Leave headroom for compiler scratch when sizing the tile.
    vmem_budget = (vmem_limit_bytes * 3) // 4

    # TODO(synk): for C < 128 the trailing dim under-fills lanes; folding
    # k = 128 // C rows into the lane dim with a segmented lane reduction
    # would recover full lane utilization for those shapes.
    sublane = _sublane_multiple(x.dtype)
    t = _pick_block_rows(n_rows, C, jnp.dtype(x.dtype).itemsize, sublane,
                         vmem_budget)
    grid = (pl.cdiv(n_rows, t),)

    out = pl.pallas_call(
        functools.partial(_biasfree_ln_kernel, float(eps), 1.0 / float(C)),
        out_shape=jax.ShapeDtypeStruct((n_rows, C), x.dtype),
        grid=grid,
        in_specs=[
            pl.BlockSpec((t, C), lambda i: (i, 0)),    # lane-dense (rows, C)
            pl.BlockSpec((1, C), lambda i: (0, 0)),    # weight, resident
        ],
        out_specs=pl.BlockSpec((t, C), lambda i: (i, 0)),
        compiler_params=pltpu.CompilerParams(
            dimension_semantics=("parallel",),         # shards across TCs (v7x)
            vmem_limit_bytes=vmem_limit_bytes,
        ),
    )(x2, w2)
    return out.reshape(orig_shape)


def biasfree_layernorm_ref(x, weight, eps=1e-5):
    xf = x.astype(jnp.float32)
    mean = jnp.mean(xf, axis=-1, keepdims=True)
    var = jnp.mean((xf - mean) ** 2, axis=-1, keepdims=True)  # unbiased=False
    out = xf / jnp.sqrt(var + eps) * weight.astype(jnp.float32)
    return out.astype(x.dtype)


if __name__ == "__main__":
    key = jax.random.PRNGKey(0)
    kx, kw = jax.random.split(key)

    # batch=2, spatial=16x16, hidden=128 (multiple of 128 -> lane-dense blocks)
    B, H, W, C = 2, 16, 16, 128
    x = jax.random.normal(kx, (B, H, W, C), dtype=jnp.float32)
    weight = jax.random.uniform(kw, (C,), jnp.float32, 0.5, 1.5)

    fn = jax.jit(biasfree_layernorm)

    # f32 path
    out = jax.block_until_ready(fn(x, weight))
    ref = biasfree_layernorm_ref(x, weight)
    assert out.shape == x.shape, out.shape
    assert bool(jnp.isfinite(out).all())
    max_err = float(jnp.max(jnp.abs(out - ref)))
    assert max_err < 1e-4, f"f32 max abs error {max_err}"

    # bf16 I/O path (v6e/v7x bandwidth win); stats still accumulate in f32.
    xb = x.astype(jnp.bfloat16)
    wb = weight.astype(jnp.bfloat16)
    out_b = jax.block_until_ready(fn(xb, wb))
    ref_b = biasfree_layernorm_ref(xb, wb).astype(jnp.float32)
    max_err_b = float(jnp.max(jnp.abs(out_b.astype(jnp.float32) - ref_b)))
    assert out_b.dtype == jnp.bfloat16
    assert max_err_b < 5e-2, f"bf16 max abs error {max_err_b}"

    print("KERNEL_OK")
</pallas_src>

<mosaic_0001>
module attributes {stable_mosaic.version = 11 : i64} {
  func.func @_biasfree_ln_kernel(%arg0: i32, %arg1: memref<64x128xf32, #tpu.memory_space<vmem>>, %arg2: memref<1x128xf32, #tpu.memory_space<vmem>>, %arg3: memref<64x128xf32, #tpu.memory_space<vmem>>) attributes {dimension_semantics = [#tpu.dimension_semantics<parallel>], iteration_bounds = array<i64: 8>, scalar_prefetch = 0 : i64, scratch_operands = 0 : i64, tpu.core_type = #tpu.core_type<tc>, window_params = [{transform_indices = @transform_0, window_bounds = array<i64: 64, 128>}, {pipeline_mode = #tpu.pipeline_mode<synchronous>, transform_indices = @transform_1, window_bounds = array<i64: 1, 128>}, {transform_indices = @transform_2, window_bounds = array<i64: 64, 128>}]} {
    %c0 = arith.constant 0 : index
    %c0_0 = arith.constant 0 : index
    %0 = vector.load %arg1[%c0, %c0_0] : memref<64x128xf32, #tpu.memory_space<vmem>>, vector<64x128xf32>
    %c0_1 = arith.constant 0 : index
    %c0_2 = arith.constant 0 : index
    %1 = vector.load %arg2[%c0_1, %c0_2] : memref<1x128xf32, #tpu.memory_space<vmem>>, vector<1x128xf32>
    %cst = arith.constant dense<0.000000e+00> : vector<64xf32>
    %2 = vector.multi_reduction <add>, %0, %cst [1] : vector<64x128xf32> to vector<64xf32>
    %3 = vector.shape_cast %2 : vector<64xf32> to vector<64x1xf32>
    %4 = arith.mulf %0, %0 : vector<64x128xf32>
    %cst_3 = arith.constant dense<0.000000e+00> : vector<64xf32>
    %5 = vector.multi_reduction <add>, %4, %cst_3 [1] : vector<64x128xf32> to vector<64xf32>
    %6 = vector.shape_cast %5 : vector<64xf32> to vector<64x1xf32>
    %cst_4 = arith.constant 7.812500e-03 : f32
    %7 = vector.broadcast %cst_4 : f32 to vector<64x1xf32>
    %8 = arith.mulf %3, %7 : vector<64x1xf32>
    %cst_5 = arith.constant 7.812500e-03 : f32
    %9 = vector.broadcast %cst_5 : f32 to vector<64x1xf32>
    %10 = arith.mulf %6, %9 : vector<64x1xf32>
    %11 = arith.mulf %8, %8 : vector<64x1xf32>
    %12 = arith.subf %10, %11 : vector<64x1xf32>
    %cst_6 = arith.constant 9.99999974E-6 : f32
    %13 = vector.broadcast %cst_6 : f32 to vector<64x1xf32>
    %14 = arith.addf %12, %13 : vector<64x1xf32>
    %15 = math.rsqrt %14 : vector<64x1xf32>
    %16 = vector.broadcast %15 : vector<64x1xf32> to vector<64x128xf32>
    %17 = arith.mulf %0, %16 : vector<64x128xf32>
    %18 = vector.broadcast %1 : vector<1x128xf32> to vector<64x128xf32>
    %19 = arith.mulf %17, %18 : vector<64x128xf32>
    %c0_7 = arith.constant 0 : index
    %c0_8 = arith.constant 0 : index
    %20 = vector.load %arg3[%c0_7, %c0_8] : memref<64x128xf32, #tpu.memory_space<vmem>>, vector<64x128xf32>
    tpu.vector_store %arg3[%c0_7, %c0_8], %19 {strides = array<i32>} : memref<64x128xf32, #tpu.memory_space<vmem>>, vector<64x128xf32>,
    return
  }
  func.func @transform_0(%arg0: i32) -> (i32, i32) {
    %c0_i32 = arith.constant 0 : i32
    %c0_i32_0 = arith.constant 0 : i32
    return %arg0, %c0_i32 : i32, i32
  }
  func.func @transform_1(%arg0: i32) -> (i32, i32) {
    %c0_i32 = arith.constant 0 : i32
    %c0_i32_0 = arith.constant 0 : i32
    %c0_i32_1 = arith.constant 0 : i32
    return %c0_i32, %c0_i32_0 : i32, i32
  }
  func.func @transform_2(%arg0: i32) -> (i32, i32) {
    %c0_i32 = arith.constant 0 : i32
    %c0_i32_0 = arith.constant 0 : i32
    return %arg0, %c0_i32 : i32, i32
  }
}

</mosaic_0001>

<llo_original>
// kernel: biasfree_layernorm.1
$region0: #{biasfree_layernorm.1}
  #allocation0 [shape = 'u32[]', space=smem, size = 0x4, offset = 0x4, fixed_abs, tag = 'smem constant byte address 0x4 - core index']
  #allocation1 [shape = 'u32[72,128]{1,0:T(1,128)}', space=vmem, size = 0x9000, scoped, tag = 'internal scratch']
  %s0 = inlined_call_operand.hbm [shape: f32[512,128], index: 0, kind: input, shape index: {}]
  %s1 = inlined_call_operand.vmem [shape: f32[1,128], index: 1, kind: input, shape index: {}]
  %s2 = inlined_call_operand.hbm [shape: f32[512,128], index: 2, kind: output, shape index: {}]
  %s3 = sld [smem:[#allocation0]]
  $region45: #{biasfree_layernorm.1} parent=0
    _
  %s5 = ssub.s32 1, %s3
  %s6 = scalar_select 0, %s5, %s3
  $region1: #{biasfree_layernorm.1} parent=0
    #allocation2 [shape = 'u8[65536]{0}', space=vmem, size = 0x10000, scoped, tag = 'input window, operand 0']
    #allocation3 [shape = 's32[2]{0}', space=sflag, size = 0x8, scoped, tag = 'scoped memory for biasfree_layernorm.1']
    #allocation4 [shape = 's32[2]{0}', space=sflag, size = 0x8, scoped, tag = 'scoped memory for biasfree_layernorm.1']
    #allocation5 [shape = 'u8[65536]{0}', space=vmem, size = 0x10000, scoped, tag = 'output window, operand 0']
    %7 = vsyncpa [#allocation3], 0
    %s8 = scalar_lea.sflag [#allocation3], 1
    %9 = vsyncpa %s8, 0
    %10 = vsyncpa [#allocation4], 0
    %s11 = scalar_lea.sflag [#allocation4], 1
    %12 = vsyncpa %s11, 0
    loop: start=0, step=1, limit=10
    $region2: #{biasfree_layernorm.1} parent=1 // loop_pre_header
      _
    $region3: #{biasfree_layernorm.1} parent=1 // loop_header
      %s14 = sphi 0, %s18
      %p15 = scmp.ge.s32.totalorder %s14, 10
      %s24 = sphi 0, %s26
      %s27 = sphi 0, %s24
      %s28 = sphi 0, %s27
      %s44 = sphi 0, %s28
      %s48 = sphi 0, %s48
      %s50 = sphi 0, %s48
      %s51 = sphi 0, %s50
      %s65 = sphi 0, %s51
      %s71 = sphi 0, %s73
      %s74 = sphi 0, %s71
      %s75 = sphi 0, %s74
      %s91 = sphi 0, %s75
    $region4: #{biasfree_layernorm.1} parent=1 // loop_header_branch
      %17 = sbr.rel (%p15) target = $region8
    $region5: #{biasfree_layernorm.1} parent=1 // loop_body
      %s19 = ssub.s32 %s14, 1
      %s20 = ssub.s32 %s14, 2
      %s21 = sadd.s32 %s14, 1
      %s22 = ssub.s32 %s14, %s21
      %p23 = scmp.eq.s32.totalorder %s22, 0
      %s25 = sadd.s32 %s24, 1
      %s26 = scalar_select %p23, %s24, %s25
      %p29 = pneg %p23
      %p30 = scmp.eq.s32.totalorder %s14, 7
      %p31 = por %p29, %p30
      %p32 = scmp.ne.s32.totalorder %s24, %s27
      %p33 = scmp.eq.s32.totalorder %s14, 0
      %p34 = por %p32, %p33
      %p35 = scmp.ne.s32.totalorder %s24, %s27
      %p36 = scmp.eq.s32.totalorder %s19, 7
      %p37 = por %p35, %p36
      %p38 = scmp.ne.s32.totalorder %s27, %s28
      %p39 = scmp.eq.s32.totalorder %s19, 0
      %p40 = por %p38, %p39
      %p41 = scmp.ne.s32.totalorder %s27, %s28
      %p42 = scmp.eq.s32.totalorder %s20, 7
      %p43 = por %p41, %p42
      %p45 = scmp.ne.s32.totalorder %s28, %s44
      %p46 = scmp.eq.s32.totalorder %s20, 0
      %p47 = por %p45, %p46
      %s49 = sadd.s32 %s48, 1
      %p52 = scmp.eq.s32.totalorder %s14, 7
      %p53 = scmp.ne.s32.totalorder %s48, %s50
      %p54 = scmp.eq.s32.totalorder %s14, 0
      %p55 = por %p53, %p54
      %p56 = scmp.ne.s32.totalorder %s48, %s50
      %p57 = scmp.eq.s32.totalorder %s19, 7
      %p58 = por %p56, %p57
      %p59 = scmp.ne.s32.totalorder %s50, %s51
      %p60 = scmp.eq.s32.totalorder %s19, 0
      %p61 = por %p59, %p60
      %p62 = scmp.ne.s32.totalorder %s50, %s51
      %p63 = scmp.eq.s32.totalorder %s20, 7
      %p64 = por %p62, %p63
      %p66 = scmp.ne.s32.totalorder %s51, %s65
      %p67 = scmp.eq.s32.totalorder %s20, 0
      %p68 = por %p66, %p67
      %s69 = ssub.s32 %s14, %s21
      %p70 = scmp.eq.s32.totalorder %s69, 0
      %s72 = sadd.s32 %s71, 1
      %s73 = scalar_select %p70, %s71, %s72
      %p76 = pneg %p70
      %p77 = scmp.eq.s32.totalorder %s14, 7
      %p78 = por %p76, %p77
      %p79 = scmp.ne.s32.totalorder %s71, %s74
      %p80 = scmp.eq.s32.totalorder %s14, 0
      %p81 = por %p79, %p80
      %p82 = scmp.ne.s32.totalorder %s71, %s74
      %p83 = scmp.eq.s32.totalorder %s19, 7
      %p84 = por %p82, %p83
      %p85 = scmp.ne.s32.totalorder %s74, %s75
      %p86 = scmp.eq.s32.totalorder %s19, 0
      %p87 = por %p85, %p86
      %p88 = scmp.ne.s32.totalorder %s74, %s75
      %p89 = scmp.eq.s32.totalorder %s20, 7
      %p90 = por %p88, %p89
      %p92 = scmp.ne.s32.totalorder %s75, %s91
      %p93 = scmp.eq.s32.totalorder %s20, 0
      %p94 = por %p92, %p93
      %p95 = scmp.le.s32.totalorder 1, %s14
      %p96 = scmp.lt.s32.totalorder %s14, 9
      %p97 = pnand %p95, %p96
      %p98 = pneg %p97
      // Predicated region
      $region9: #{biasfree_layernorm.1} parent=5 // pred_check
        _
      $region10: #{biasfree_layernorm.1} parent=5 // pred_check_branch
        %100 = sbr.rel (%p97) target = $region12
      $region11: #{biasfree_layernorm.1} parent=5 // pred_region
        %s101 = ssub.s32 %s14, 1
        // Predicated region
        $region13: #{biasfree_layernorm.1} parent=11 // pred_check
          %p102 = pneg %p61
        $region14: #{biasfree_layernorm.1} parent=11 // pred_check_branch
          %104 = sbr.rel (%p102) target = $region16
        $region15: #{biasfree_layernorm.1} parent=11 // pred_region
          _
        $region16: #{biasfree_layernorm.1} parent=11 // pred_fallthru
          _
      $region12: #{biasfree_layernorm.1} parent=5 // pred_fallthru
        _
      %p105 = scmp.lt.s32.totalorder %s14, 8
      // Predicated region
      $region17: #{biasfree_layernorm.1} parent=5 // pred_check
        %p106 = pneg %p105
      $region18: #{biasfree_layernorm.1} parent=5 // pred_check_branch
        %108 = sbr.rel (%p106) target = $region20
      $region19: #{biasfree_layernorm.1} parent=5 // pred_region
        // Predicated region
        $region21: #{biasfree_layernorm.1} parent=19 // pred_check
          %p109 = pneg %p34
        $region22: #{biasfree_layernorm.1} parent=19 // pred_check_branch
          %111 = sbr.rel (%p109) target = $region24
        $region23: #{biasfree_layernorm.1} parent=19 // pred_region
          %s112 = sand.u32 %s24, 1
          %s113 = scalar_lea.sflag [#allocation3], %s112
          %s114 = sand.u32 %s24, 1
          %s115 = smul.addr %s114, 64
          %s116 = scalar_lea.vmem [#allocation2], %s115
          %s117 = smul.u32 8, %s14
          %119 = vsyncadd %s113, 0
          %s120 = smul.addr %s117, 8
          %s121 = scalar_lea.hbm %s0, %s120
          %s122 = sshll.u32 %s121, 4
          %s123 = int_to_ptr.hbm [resolvable:$true] %s122
          %s124 = sshll.u32 %s116, 4
          %s125 = int_to_ptr.vmem [resolvable:$true] %s124
          %130 = dma.hbm_to_vmem [thread:$0]  %s123, 1024, %s125, %s113, 128, 128, 8
        $region24: #{biasfree_layernorm.1} parent=19 // pred_fallthru
          _
      $region20: #{biasfree_layernorm.1} parent=5 // pred_fallthru
        _
      %p131 = scmp.le.s32.totalorder 1, %s14
      %p132 = scmp.lt.s32.totalorder %s14, 9
      %p133 = pnand %p131, %p132
      %p134 = pneg %p133
      // Predicated region
      $region25: #{biasfree_layernorm.1} parent=5 // pred_check
        _
      $region26: #{biasfree_layernorm.1} parent=5 // pred_check_branch
        %136 = sbr.rel (%p133) target = $region28
      $region27: #{biasfree_layernorm.1} parent=5 // pred_region
        %s137 = ssub.s32 %s14, 1
        %s138 = sand.u32 %s27, 1
        %s139 = scalar_lea.sflag [#allocation3], %s138
        %s140 = sand.u32 %s27, 1
        %s141 = smul.addr %s140, 64
        %s142 = scalar_lea.vmem [#allocation2], %s141
        // Predicated region
        $region29: #{biasfree_layernorm.1} parent=27 // pred_check
          %p143 = pneg %p40
        $region30: #{biasfree_layernorm.1} parent=27 // pred_check_branch
          %145 = sbr.rel (%p143) target = $region32
        $region31: #{biasfree_layernorm.1} parent=27 // pred_region
          %147 = dma.done %s139, 1024
        $region32: #{biasfree_layernorm.1} parent=27 // pred_fallthru
          _
        %s148 = sand.u32 %s27, 1
        %s149 = scalar_lea.sflag [#allocation3], %s148
        %s150 = sand.u32 %s27, 1
        %s151 = smul.addr %s150, 64
        %s152 = scalar_lea.vmem [#allocation2], %s151
        %p153 = pneg %p40
        %p154 = pneg %p37
        %p155 = pneg %p61
        %p156 = pneg %p58
        %p157 = pneg %p87
        %p158 = pneg %p84
        %s159 = sand.u32 %s74, 1
        %s160 = scalar_lea.sflag [#allocation4], %s159
        %s161 = sand.u32 %s74, 1
        %s162 = smul.addr %s161, 64
        %s163 = scalar_lea.vmem [#allocation5], %s162
        %s164 = smul.u32 8, %s19
        %s165 = smul.u32 8, %s19
        %v166 = vld [vmem:[%s142] sm:$0xff]
        %v167 = vld [vmem:[%s142 + $0x8] sm:$0xff]
        %v168 = vld [vmem:[%s142 + $0x10] sm:$0xff]
        %v169 = vld [vmem:[%s142 + $0x18] sm:$0xff]
        %v170 = vld [vmem:[%s142 + $0x20] sm:$0xff]
        %v171 = vld [vmem:[%s142 + $0x28] sm:$0xff]
        %v172 = vld [vmem:[%s142 + $0x30] sm:$0xff]
        %v173 = vld [vmem:[%s142 + $0x38] sm:$0xff]
        %v174 = vld [vmem:[%s1] sm:$0x1]
        %175 = vadd.xlane.f32.xlu0 %v166
        %v176 = vpop.xlane.xlu0 %175
        %177 = vadd.xlane.f32.xlu0 %v167
        %v178 = vpop.xlane.xlu0 %177
        %179 = vadd.xlane.f32.xlu0 %v168
        %v180 = vpop.xlane.xlu0 %179
        %181 = vadd.xlane.f32.xlu0 %v169
        %v182 = vpop.xlane.xlu0 %181
        %183 = vadd.xlane.f32.xlu0 %v170
        %v184 = vpop.xlane.xlu0 %183
        %185 = vadd.xlane.f32.xlu0 %v171
        %v186 = vpop.xlane.xlu0 %185
        %187 = vadd.xlane.f32.xlu0 %v172
        %v188 = vpop.xlane.xlu0 %187
        %189 = vadd.xlane.f32.xlu0 %v173
        %v190 = vpop.xlane.xlu0 %189
        %v191 = vmul.f32 %v166, %v166
        %v192 = vmul.f32 %v167, %v167
        %v193 = vmul.f32 %v168, %v168
        %v194 = vmul.f32 %v169, %v169
        %v195 = vmul.f32 %v170, %v170
        %v196 = vmul.f32 %v171, %v171
        %v197 = vmul.f32 %v172, %v172
        %v198 = vmul.f32 %v173, %v173
        %199 = vadd.xlane.f32.xlu0 %v191
        %v200 = vpop.xlane.xlu0 %199
        %201 = vadd.xlane.f32.xlu0 %v192
        %v202 = vpop.xlane.xlu0 %201
        %203 = vadd.xlane.f32.xlu0 %v193
        %v204 = vpop.xlane.xlu0 %203
        %205 = vadd.xlane.f32.xlu0 %v194
        %v206 = vpop.xlane.xlu0 %205
        %207 = vadd.xlane.f32.xlu0 %v195
        %v208 = vpop.xlane.xlu0 %207
        %209 = vadd.xlane.f32.xlu0 %v196
        %v210 = vpop.xlane.xlu0 %209
        %211 = vadd.xlane.f32.xlu0 %v197
        %v212 = vpop.xlane.xlu0 %211
        %213 = vadd.xlane.f32.xlu0 %v198
        %v214 = vpop.xlane.xlu0 %213
        %v215 = vmul.f32 %v176, 0.0078125
        %v216 = vmul.f32 %v178, 0.0078125
        %v217 = vmul.f32 %v180, 0.0078125
        %v218 = vmul.f32 %v182, 0.0078125
        %v219 = vmul.f32 %v184, 0.0078125
        %v220 = vmul.f32 %v186, 0.0078125
        %v221 = vmul.f32 %v188, 0.0078125
        %v222 = vmul.f32 %v190, 0.0078125
        %v223 = vmul.f32 %v200, 0.0078125
        %v224 = vmul.f32 %v202, 0.0078125
        %v225 = vmul.f32 %v204, 0.0078125
        %v226 = vmul.f32 %v206, 0.0078125
        %v227 = vmul.f32 %v208, 0.0078125
        %v228 = vmul.f32 %v210, 0.0078125
        %v229 = vmul.f32 %v212, 0.0078125
        %v230 = vmul.f32 %v214, 0.0078125
        %v231 = vmul.f32 %v215, %v215
        %v232 = vmul.f32 %v216, %v216
        %v233 = vmul.f32 %v217, %v217
        %v234 = vmul.f32 %v218, %v218
        %v235 = vmul.f32 %v219, %v219
        %v236 = vmul.f32 %v220, %v220
        %v237 = vmul.f32 %v221, %v221
        %v238 = vmul.f32 %v222, %v222
        %v239 = vsub.f32 %v223, %v231
        %v240 = vsub.f32 %v224, %v232
        %v241 = vsub.f32 %v225, %v233
        %v242 = vsub.f32 %v226, %v234
        %v243 = vsub.f32 %v227, %v235
        %v244 = vsub.f32 %v228, %v236
        %v245 = vsub.f32 %v229, %v237
        %v246 = vsub.f32 %v230, %v238
        %v247 = vadd.f32 %v239, 1e-05
        %v248 = vadd.f32 %v240, 1e-05
        %v249 = vadd.f32 %v241, 1e-05
        %v250 = vadd.f32 %v242, 1e-05
        %v251 = vadd.f32 %v243, 1e-05
        %v252 = vadd.f32 %v244, 1e-05
        %v253 = vadd.f32 %v245, 1e-05
        %v254 = vadd.f32 %v246, 1e-05
        %v255 = vrsqrt.pop %v247
        %v256 = vmul.f32 %v255, %v247
        %v257 = vmul.f32 %v256, %v255
        %v258 = vmul.f32 0.5, %v257
        %v259 = vsub.f32 1.5, %v258
        %v260 = vmul.f32 %v255, %v259
        %vm261 = vweird.f32 %v247
        %vm262 = vweird.f32 %v255
        %vm263 = vmor %vm261, %vm262
        %v264 = vsel %vm263, %v255, %v260
        %v265 = vrsqrt.pop %v248
        %v266 = vmul.f32 %v265, %v248
        %v267 = vmul.f32 %v266, %v265
        %v268 = vmul.f32 0.5, %v267
        %v269 = vsub.f32 1.5, %v268
        %v270 = vmul.f32 %v265, %v269
        %vm271 = vweird.f32 %v248
        %vm272 = vweird.f32 %v265
        %vm273 = vmor %vm271, %vm272
        %v274 = vsel %vm273, %v265, %v270
        %v275 = vrsqrt.pop %v249
        %v276 = vmul.f32 %v275, %v249
        %v277 = vmul.f32 %v276, %v275
        %v278 = vmul.f32 0.5, %v277
        %v279 = vsub.f32 1.5, %v278
        %v280 = vmul.f32 %v275, %v279
        %vm281 = vweird.f32 %v249
        %vm282 = vweird.f32 %v275
        %vm283 = vmor %vm281, %vm282
        %v284 = vsel %vm283, %v275, %v280
        %v285 = vrsqrt.pop %v250
        %v286 = vmul.f32 %v285, %v250
        %v287 = vmul.f32 %v286, %v285
        %v288 = vmul.f32 0.5, %v287
        %v289 = vsub.f32 1.5, %v288
        %v290 = vmul.f32 %v285, %v289
        %vm291 = vweird.f32 %v250
        %vm292 = vweird.f32 %v285
        %vm293 = vmor %vm291, %vm292
        %v294 = vsel %vm293, %v285, %v290
        %v295 = vrsqrt.pop %v251
        %v296 = vmul.f32 %v295, %v251
        %v297 = vmul.f32 %v296, %v295
        %v298 = vmul.f32 0.5, %v297
        %v299 = vsub.f32 1.5, %v298
        %v300 = vmul.f32 %v295, %v299
        %vm301 = vweird.f32 %v251
        %vm302 = vweird.f32 %v295
        %vm303 = vmor %vm301, %vm302
        %v304 = vsel %vm303, %v295, %v300
        %v305 = vrsqrt.pop %v252
        %v306 = vmul.f32 %v305, %v252
        %v307 = vmul.f32 %v306, %v305
        %v308 = vmul.f32 0.5, %v307
        %v309 = vsub.f32 1.5, %v308
        %v310 = vmul.f32 %v305, %v309
        %vm311 = vweird.f32 %v252
        %vm312 = vweird.f32 %v305
        %vm313 = vmor %vm311, %vm312
        %v314 = vsel %vm313, %v305, %v310
        %v315 = vrsqrt.pop %v253
        %v316 = vmul.f32 %v315, %v253
        %v317 = vmul.f32 %v316, %v315
        %v318 = vmul.f32 0.5, %v317
        %v319 = vsub.f32 1.5, %v318
        %v320 = vmul.f32 %v315, %v319
        %vm321 = vweird.f32 %v253
        %vm322 = vweird.f32 %v315
        %vm323 = vmor %vm321, %vm322
        %v324 = vsel %vm323, %v315, %v320
        %v325 = vrsqrt.pop %v254
        %v326 = vmul.f32 %v325, %v254
        %v327 = vmul.f32 %v326, %v325
        %v328 = vmul.f32 0.5, %v327
        %v329 = vsub.f32 1.5, %v328
        %v330 = vmul.f32 %v325, %v329
        %vm331 = vweird.f32 %v254
        %vm332 = vweird.f32 %v325
        %vm333 = vmor %vm331, %vm332
        %v334 = vsel %vm333, %v325, %v330
        %v335 = vmul.f32 %v166, %v264
        %v336 = vmul.f32 %v167, %v274
        %v337 = vmul.f32 %v168, %v284
        %v338 = vmul.f32 %v169, %v294
        %v339 = vmul.f32 %v170, %v304
        %v340 = vmul.f32 %v171, %v314
        %v341 = vmul.f32 %v172, %v324
        %v342 = vmul.f32 %v173, %v334
        %v344 = vperm.slane %v174, 0
        %v346 = vmul.f32 %v335, %v344
        %v347 = vmul.f32 %v336, %v344
        %v348 = vmul.f32 %v337, %v344
        %v349 = vmul.f32 %v338, %v344
        %v350 = vmul.f32 %v339, %v344
        %v351 = vmul.f32 %v340, %v344
        %v352 = vmul.f32 %v341, %v344
        %v353 = vmul.f32 %v342, %v344
        %354 = vst [vmem:[%s163] sm:$0xff] %v346
        %355 = vst [vmem:[%s163 + $0x8] sm:$0xff] %v347
        %356 = vst [vmem:[%s163 + $0x10] sm:$0xff] %v348
        %357 = vst [vmem:[%s163 + $0x18] sm:$0xff] %v349
        %358 = vst [vmem:[%s163 + $0x20] sm:$0xff] %v350
        %359 = vst [vmem:[%s163 + $0x28] sm:$0xff] %v351
        %360 = vst [vmem:[%s163 + $0x30] sm:$0xff] %v352
        %361 = vst [vmem:[%s163 + $0x38] sm:$0xff] %v353
        %s362 = sand.u32 %s74, 1
        %s363 = scalar_lea.sflag [#allocation4], %s362
        %s364 = sand.u32 %s74, 1
        %s365 = smul.addr %s364, 64
        %s366 = scalar_lea.vmem [#allocation5], %s365
        // Predicated region
        $region33: #{biasfree_layernorm.1} parent=27 // pred_check
          %p367 = pneg %p84
        $region34: #{biasfree_layernorm.1} parent=27 // pred_check_branch
          %369 = sbr.rel (%p367) target = $region36
        $region35: #{biasfree_layernorm.1} parent=27 // pred_region
          %s370 = smul.u32 8, %s19
          %372 = vsyncadd %s363, 0
          %s373 = smul.addr %s370, 8
          %s374 = scalar_lea.hbm %s2, %s373
          %s375 = sshll.u32 %s366, 4
          %s376 = int_to_ptr.vmem [resolvable:$true] %s375
          %s377 = sshll.u32 %s374, 4
          %s378 = int_to_ptr.hbm [resolvable:$true] %s377
          %383 = dma.vmem_to_hbm [thread:$0]  %s376, 1024, %s378, %s363, 128, 128, 8
        $region36: #{biasfree_layernorm.1} parent=27 // pred_fallthru
          _
      $region28: #{biasfree_layernorm.1} parent=5 // pred_fallthru
        _
      %p384 = scmp.le.s32.totalorder 2, %s14
      // Predicated region
      $region37: #{biasfree_layernorm.1} parent=5 // pred_check
        %p385 = pneg %p384
      $region38: #{biasfree_layernorm.1} parent=5 // pred_check_branch
        %387 = sbr.rel (%p385) target = $region40
      $region39: #{biasfree_layernorm.1} parent=5 // pred_region
        %s388 = ssub.s32 %s14, 2
        // Predicated region
        $region41: #{biasfree_layernorm.1} parent=39 // pred_check
          %p389 = pneg %p90
        $region42: #{biasfree_layernorm.1} parent=39 // pred_check_branch
          %391 = sbr.rel (%p389) target = $region44
        $region43: #{biasfree_layernorm.1} parent=39 // pred_region
          %s392 = sand.u32 %s75, 1
          %s393 = scalar_lea.sflag [#allocation4], %s392
          %s394 = sand.u32 %s75, 1
          %s395 = smul.addr %s394, 64
          %s396 = scalar_lea.vmem [#allocation5], %s395
          %398 = dma.done %s393, 1024
        $region44: #{biasfree_layernorm.1} parent=39 // pred_fallthru
          _
      $region40: #{biasfree_layernorm.1} parent=5 // pred_fallthru
        _
    $region6: #{biasfree_layernorm.1} parent=1 // loop_footer
      %s18 = sadd.s32 1, %s14
    $region7: #{biasfree_layernorm.1} parent=1 // loop_footer_branch
      %13 = sbr.rel target = $region3
    $region8: #{biasfree_layernorm.1} parent=1 // loop_exit
      _
    %399 = vsyncpa [#allocation3], 1
    %s400 = scalar_lea.sflag [#allocation3], 1
    %401 = vsyncpa %s400, 1
    %402 = vsyncpa [#allocation4], 1
    %s403 = scalar_lea.sflag [#allocation4], 1
    %404 = vsyncpa %s403, 1

</llo_original>
